<compile_context>
chip_gen: v5e
topology: v5e:2x2
jax: 0.10.0
libtpu: 0.0.40
codegen_flags: <defaults>
</compile_context>

<pallas_src>
import functools

import jax
import jax.numpy as jnp
from jax.experimental import pallas as pl
from jax.experimental.pallas import tpu as pltpu


def _hpf_kernel(x_ref, o_ref, *, inv_w_hpf):
    # x_ref / o_ref: (TC, H, W) blocks in VMEM.
    _, H, W = o_ref.shape
    x = x_ref[...].astype(jnp.float32)

    col = jax.lax.broadcasted_iota(jnp.int32, x.shape, 2)  # lane index (W)
    row = jax.lax.broadcasted_iota(jnp.int32, x.shape, 1)  # sublane index (H)

    # Horizontal (W / lane axis) 1x3 sum with zero padding at the borders.
    # roll(shift=1)[j] = x[j-1]; roll(shift=W-1)[j] = x[j+1]  (non-negative shifts only).
    left = jnp.where(col == 0, 0.0, pltpu.roll(x, shift=1, axis=2))
    right = jnp.where(col == W - 1, 0.0, pltpu.roll(x, shift=W - 1, axis=2))
    row_sum = x + left + right

    # Vertical (H / sublane axis) 1x3 sum of row_sum with zero padding.
    up = jnp.where(row == 0, 0.0, pltpu.roll(row_sum, shift=1, axis=1))
    down = jnp.where(row == H - 1, 0.0, pltpu.roll(row_sum, shift=H - 1, axis=1))
    box = row_sum + up + down

    # 3x3 high-pass: 8*center - 8 neighbors == 9*center - box3x3.
    o_ref[...] = ((9.0 * x - box) * inv_w_hpf).astype(o_ref.dtype)


_VMEM_BUDGET_BYTES = 20 * 1024 * 1024   # accounted per-step footprint
_VMEM_LIMIT_BYTES = 40 * 1024 * 1024    # scoped-VMEM limit (headroom for compiler temporaries)


def _num_tensorcores():
    try:
        kind = jax.devices()[0].device_kind.lower()
        if "v7" in kind:
            return 2
    except Exception:
        pass
    return 1


def _pick_planes_per_step(nc, H, W, in_itemsize, out_itemsize):
    """Largest planes-per-block that fits the VMEM budget; >=4 grid steps on 2-TC chips."""
    plane = H * W
    # Double-buffered input + output blocks, plus ~7 f32/i32-sized live intermediates
    # (x, left/right, row_sum, up/down, iota masks) the compiler keeps in VMEM.
    bytes_per_plane = plane * (2 * in_itemsize + 2 * out_itemsize + 7 * 4)
    cap = max(1, _VMEM_BUDGET_BYTES // bytes_per_plane)
    tc = min(nc, cap)

    min_steps = 4 if _num_tensorcores() >= 2 else 1
    if min_steps > 1:
        tc = min(tc, max(1, -(-nc // min_steps)))
    return tc


def high_pass_filter(x, w_hpf=1.0):
    """x: (N, C, H, W) -> (N, C, H, W); depthwise conv with the fixed Laplacian kernel / w_hpf."""
    if w_hpf == 0:
        raise ValueError("w_hpf must be non-zero (PyTorch module would produce an inf filter).")

    N, C, H, W = x.shape
    NC = N * C
    x_flat = x.reshape(NC, H, W)

    tc = _pick_planes_per_step(NC, H, W, x.dtype.itemsize, x.dtype.itemsize)
    grid = (pl.cdiv(NC, tc),)  # partial last block is masked on writeback

    kernel = functools.partial(_hpf_kernel, inv_w_hpf=float(1.0 / w_hpf))

    out_flat = pl.pallas_call(
        kernel,
        out_shape=jax.ShapeDtypeStruct((NC, H, W), x.dtype),
        grid_spec=pltpu.PrefetchScalarGridSpec(
            num_scalar_prefetch=0,
            grid=grid,
            in_specs=[pl.BlockSpec((tc, H, W), lambda i: (i, 0, 0))],
            out_specs=pl.BlockSpec((tc, H, W), lambda i: (i, 0, 0)),
        ),
        compiler_params=pltpu.CompilerParams(
            dimension_semantics=("parallel",),
            vmem_limit_bytes=_VMEM_LIMIT_BYTES),
    )(x_flat)

    return out_flat.reshape(N, C, H, W)


def _reference(x, w_hpf=1.0):
    # Pure-JAX reference: depthwise conv2d with the same kernel, padding=1.
    filt = jnp.array([[-1.0, -1.0, -1.0],
                      [-1.0, 8.0, -1.0],
                      [-1.0, -1.0, -1.0]], dtype=jnp.float32) / w_hpf
    C = x.shape[1]
    k = jnp.broadcast_to(filt, (C, 1, 3, 3))  # (O=C, I/groups=1, 3, 3)
    return jax.lax.conv_general_dilated(
        x.astype(jnp.float32), k, window_strides=(1, 1), padding=((1, 1), (1, 1)),
        dimension_numbers=("NCHW", "OIHW", "NCHW"), feature_group_count=C,
    ).astype(x.dtype)


if __name__ == "__main__":
    key = jax.random.PRNGKey(0)
    N, C, H, W = 2, 4, 16, 16
    x = jax.random.normal(key, (N, C, H, W), dtype=jnp.float32)

    out = high_pass_filter(x, w_hpf=1.0)
    out = jax.block_until_ready(out)

    ref = _reference(x, w_hpf=1.0)
    assert out.shape == (N, C, H, W)
    assert jnp.allclose(out, ref, atol=1e-4, rtol=1e-4)
    print("KERNEL_OK")
</pallas_src>

<mosaic_0001>
module attributes {stable_mosaic.version = 11 : i64} {
  func.func @_hpf_kernel(%arg0: i32, %arg1: memref<8x16x16xf32, #tpu.memory_space<vmem>>, %arg2: memref<8x16x16xf32, #tpu.memory_space<vmem>>) attributes {dimension_semantics = [#tpu.dimension_semantics<parallel>], iteration_bounds = array<i64: 1>, scalar_prefetch = 0 : i64, scratch_operands = 0 : i64, tpu.core_type = #tpu.core_type<tc>, window_params = [{transform_indices = @transform_0, window_bounds = array<i64: 8, 16, 16>}, {transform_indices = @transform_1, window_bounds = array<i64: 8, 16, 16>}]} {
    %c0 = arith.constant 0 : index
    %c0_0 = arith.constant 0 : index
    %c0_1 = arith.constant 0 : index
    %0 = vector.load %arg1[%c0, %c0_0, %c0_1] : memref<8x16x16xf32, #tpu.memory_space<vmem>>, vector<8x16x16xf32>
    %1 = tpu.iota {dimensions = array<i32: 2>} : vector<8x16x16xi32>
    %2 = tpu.iota {dimensions = array<i32: 1>} : vector<8x16x16xi32>
    %c0_i32 = arith.constant 0 : i32
    %3 = vector.broadcast %c0_i32 : i32 to vector<8x16x16xi32>
    %4 = arith.cmpi eq, %1, %3 : vector<8x16x16xi32>
    %c1_i32 = arith.constant 1 : i32
    %5 = tpu.dynamic_rotate %0 by %c1_i32 dim 2 : vector<8x16x16xf32>, i32 -> vector<8x16x16xf32>
    %cst = arith.constant 0.000000e+00 : f32
    %6 = vector.broadcast %cst : f32 to vector<8x16x16xf32>
    %7 = arith.select %4, %6, %5 : vector<8x16x16xi1>, vector<8x16x16xf32>
    %c15_i32 = arith.constant 15 : i32
    %8 = vector.broadcast %c15_i32 : i32 to vector<8x16x16xi32>
    %9 = arith.cmpi eq, %1, %8 : vector<8x16x16xi32>
    %c15_i32_2 = arith.constant 15 : i32
    %10 = tpu.dynamic_rotate %0 by %c15_i32_2 dim 2 : vector<8x16x16xf32>, i32 -> vector<8x16x16xf32>
    %cst_3 = arith.constant 0.000000e+00 : f32
    %11 = vector.broadcast %cst_3 : f32 to vector<8x16x16xf32>
    %12 = arith.select %9, %11, %10 : vector<8x16x16xi1>, vector<8x16x16xf32>
    %13 = arith.addf %0, %7 : vector<8x16x16xf32>
    %14 = arith.addf %13, %12 : vector<8x16x16xf32>
    %c0_i32_4 = arith.constant 0 : i32
    %15 = vector.broadcast %c0_i32_4 : i32 to vector<8x16x16xi32>
    %16 = arith.cmpi eq, %2, %15 : vector<8x16x16xi32>
    %c1_i32_5 = arith.constant 1 : i32
    %17 = tpu.dynamic_rotate %14 by %c1_i32_5 dim 1 : vector<8x16x16xf32>, i32 -> vector<8x16x16xf32>
    %cst_6 = arith.constant 0.000000e+00 : f32
    %18 = vector.broadcast %cst_6 : f32 to vector<8x16x16xf32>
    %19 = arith.select %16, %18, %17 : vector<8x16x16xi1>, vector<8x16x16xf32>
    %c15_i32_7 = arith.constant 15 : i32
    %20 = vector.broadcast %c15_i32_7 : i32 to vector<8x16x16xi32>
    %21 = arith.cmpi eq, %2, %20 : vector<8x16x16xi32>
    %c15_i32_8 = arith.constant 15 : i32
    %22 = tpu.dynamic_rotate %14 by %c15_i32_8 dim 1 : vector<8x16x16xf32>, i32 -> vector<8x16x16xf32>
    %cst_9 = arith.constant 0.000000e+00 : f32
    %23 = vector.broadcast %cst_9 : f32 to vector<8x16x16xf32>
    %24 = arith.select %21, %23, %22 : vector<8x16x16xi1>, vector<8x16x16xf32>
    %25 = arith.addf %14, %19 : vector<8x16x16xf32>
    %26 = arith.addf %25, %24 : vector<8x16x16xf32>
    %cst_10 = arith.constant 9.000000e+00 : f32
    %27 = vector.broadcast %cst_10 : f32 to vector<8x16x16xf32>
    %28 = arith.mulf %27, %0 : vector<8x16x16xf32>
    %29 = arith.subf %28, %26 : vector<8x16x16xf32>
    %cst_11 = arith.constant 1.000000e+00 : f32
    %30 = vector.broadcast %cst_11 : f32 to vector<8x16x16xf32>
    %31 = arith.mulf %29, %30 : vector<8x16x16xf32>
    %c0_12 = arith.constant 0 : index
    %c0_13 = arith.constant 0 : index
    %c0_14 = arith.constant 0 : index
    %32 = vector.load %arg2[%c0_12, %c0_13, %c0_14] : memref<8x16x16xf32, #tpu.memory_space<vmem>>, vector<8x16x16xf32>
    tpu.vector_store %arg2[%c0_12, %c0_13, %c0_14], %31 {strides = array<i32>} : memref<8x16x16xf32, #tpu.memory_space<vmem>>, vector<8x16x16xf32>,
    return
  }
  func.func @transform_0(%arg0: i32) -> (i32, i32, i32) {
    %c0_i32 = arith.constant 0 : i32
    %c0_i32_0 = arith.constant 0 : i32
    %c0_i32_1 = arith.constant 0 : i32
    return %arg0, %c0_i32, %c0_i32_0 : i32, i32, i32
  }
  func.func @transform_1(%arg0: i32) -> (i32, i32, i32) {
    %c0_i32 = arith.constant 0 : i32
    %c0_i32_0 = arith.constant 0 : i32
    %c0_i32_1 = arith.constant 0 : i32
    return %arg0, %c0_i32, %c0_i32_0 : i32, i32, i32
  }
}

</mosaic_0001>

<llo_original>
// kernel: tpu_custom_call.1
$region0: #{tpu_custom_call.1}
  #allocation0 [shape = 'u32[]', space=smem, size = 0x4, offset = 0x4, fixed_abs, tag = 'smem constant byte address 0x4 - core index']
  #allocation1 [shape = 'u32[72,128]{1,0:T(1,128)}', space=vmem, size = 0x9000, scoped, tag = 'internal scratch']
  %s0 = inlined_call_operand.hbm [shape: f32[8,16,16], index: 0, kind: input, shape index: {}]
  %s1 = inlined_call_operand.hbm [shape: f32[8,16,16], index: 1, kind: output, shape index: {}]
  %s2 = sld [smem:[#allocation0]]
  $region18: #{tpu_custom_call.1} parent=0
    _
  %s4 = ssub.s32 1, %s2
  %s5 = scalar_select 0, %s4, %s2
  $region1: #{tpu_custom_call.1} parent=0
    #allocation2 [shape = 'u8[65536]{0}', space=vmem, size = 0x10000, scoped, tag = 'input window, operand 0, single buffered']
    #allocation3 [shape = 's32[1]{0}', space=sflag, size = 0x4, scoped, tag = 'scoped memory for tpu_custom_call.1']
    #allocation4 [shape = 's32[1]{0}', space=sflag, size = 0x4, scoped, tag = 'scoped memory for tpu_custom_call.1']
    #allocation5 [shape = 'u8[65536]{0}', space=vmem, size = 0x10000, scoped, tag = 'output window, operand 0, single buffered']
    %6 = vsyncpa [#allocation3], 0
    %7 = vsyncpa [#allocation4], 0
    // Predicated region
    $region2: #{tpu_custom_call.1} parent=1 // pred_check
      _
    $region3: #{tpu_custom_call.1} parent=1 // pred_check_branch
      %9 = sbr.rel (0) target = $region5
    $region4: #{tpu_custom_call.1} parent=1 // pred_region
      %11 = vsyncadd [#allocation3], 0
      %s12 = sshll.u32 %s0, 4
      %s13 = int_to_ptr.hbm [resolvable:$true] %s12
      %s14 = sshll.u32 [#allocation2], 4
      %s15 = int_to_ptr.vmem [resolvable:$true] %s14
      %20 = dma.hbm_to_vmem [thread:$0]  %s13, 2048, %s15, [#allocation3], 128, 128, 8
    $region5: #{tpu_custom_call.1} parent=1 // pred_fallthru
      _
    // Predicated region
    $region6: #{tpu_custom_call.1} parent=1 // pred_check
      _
    $region7: #{tpu_custom_call.1} parent=1 // pred_check_branch
      %22 = sbr.rel (0) target = $region9
    $region8: #{tpu_custom_call.1} parent=1 // pred_region
      %24 = dma.done [#allocation3], 2048
    $region9: #{tpu_custom_call.1} parent=1 // pred_fallthru
      _
    %v25 = vld [vmem:[#allocation2] sm:$0xff]
    %v26 = vld [vmem:[#allocation2 + $0x8] sm:$0xff]
    %v27 = vld [vmem:[#allocation2 + $0x10] sm:$0xff]
    %v28 = vld [vmem:[#allocation2 + $0x18] sm:$0xff]
    %v29 = vld [vmem:[#allocation2 + $0x20] sm:$0xff]
    %v30 = vld [vmem:[#allocation2 + $0x28] sm:$0xff]
    %v31 = vld [vmem:[#allocation2 + $0x30] sm:$0xff]
    %v32 = vld [vmem:[#allocation2 + $0x38] sm:$0xff]
    %v33 = vld [vmem:[#allocation2 + $0x40] sm:$0xff]
    %v34 = vld [vmem:[#allocation2 + $0x48] sm:$0xff]
    %v35 = vld [vmem:[#allocation2 + $0x50] sm:$0xff]
    %v36 = vld [vmem:[#allocation2 + $0x58] sm:$0xff]
    %v37 = vld [vmem:[#allocation2 + $0x60] sm:$0xff]
    %v38 = vld [vmem:[#allocation2 + $0x68] sm:$0xff]
    %v39 = vld [vmem:[#allocation2 + $0x70] sm:$0xff]
    %v40 = vld [vmem:[#allocation2 + $0x78] sm:$0xff]
    %v41 = vlaneseq
    %v42 = vand.u32 %v41, 127
    %v43 = vlaneseq
    %v44 = vshrl.u32 %v43, 7
    %v45 = vadd.s32 %v44, 8
    %vm46 = vcmp.eq.s32.totalorder %v42, 0
    %vm47 = vcmask 1047680
    %48 = vrot.lane.b32.xlu0 %v25, 16
    %v49 = vpop.permute.xlu0 %48
    %v50 = vsel %vm47, %v49, %v25
    %51 = vrot.lane.b32.xlu0 %v26, 16
    %v52 = vpop.permute.xlu0 %51
    %v53 = vsel %vm47, %v52, %v26
    %54 = vrot.lane.b32.xlu0 %v27, 16
    %v55 = vpop.permute.xlu0 %54
    %v56 = vsel %vm47, %v55, %v27
    %57 = vrot.lane.b32.xlu0 %v28, 16
    %v58 = vpop.permute.xlu0 %57
    %v59 = vsel %vm47, %v58, %v28
    %60 = vrot.lane.b32.xlu0 %v29, 16
    %v61 = vpop.permute.xlu0 %60
    %v62 = vsel %vm47, %v61, %v29
    %63 = vrot.lane.b32.xlu0 %v30, 16
    %v64 = vpop.permute.xlu0 %63
    %v65 = vsel %vm47, %v64, %v30
    %66 = vrot.lane.b32.xlu0 %v31, 16
    %v67 = vpop.permute.xlu0 %66
    %v68 = vsel %vm47, %v67, %v31
    %69 = vrot.lane.b32.xlu0 %v32, 16
    %v70 = vpop.permute.xlu0 %69
    %v71 = vsel %vm47, %v70, %v32
    %72 = vrot.lane.b32.xlu0 %v33, 16
    %v73 = vpop.permute.xlu0 %72
    %v74 = vsel %vm47, %v73, %v33
    %75 = vrot.lane.b32.xlu0 %v34, 16
    %v76 = vpop.permute.xlu0 %75
    %v77 = vsel %vm47, %v76, %v34
    %78 = vrot.lane.b32.xlu0 %v35, 16
    %v79 = vpop.permute.xlu0 %78
    %v80 = vsel %vm47, %v79, %v35
    %81 = vrot.lane.b32.xlu0 %v36, 16
    %v82 = vpop.permute.xlu0 %81
    %v83 = vsel %vm47, %v82, %v36
    %84 = vrot.lane.b32.xlu0 %v37, 16
    %v85 = vpop.permute.xlu0 %84
    %v86 = vsel %vm47, %v85, %v37
    %87 = vrot.lane.b32.xlu0 %v38, 16
    %v88 = vpop.permute.xlu0 %87
    %v89 = vsel %vm47, %v88, %v38
    %90 = vrot.lane.b32.xlu0 %v39, 16
    %v91 = vpop.permute.xlu0 %90
    %v92 = vsel %vm47, %v91, %v39
    %93 = vrot.lane.b32.xlu0 %v40, 16
    %v94 = vpop.permute.xlu0 %93
    %v95 = vsel %vm47, %v94, %v40
    %96 = vrot.lane.b32.xlu0 %v50, 16
    %v97 = vpop.permute.xlu0 %96
    %98 = vrot.lane.b32.xlu0 %v53, 16
    %v99 = vpop.permute.xlu0 %98
    %100 = vrot.lane.b32.xlu0 %v56, 16
    %v101 = vpop.permute.xlu0 %100
    %102 = vrot.lane.b32.xlu0 %v59, 16
    %v103 = vpop.permute.xlu0 %102
    %104 = vrot.lane.b32.xlu0 %v62, 16
    %v105 = vpop.permute.xlu0 %104
    %106 = vrot.lane.b32.xlu0 %v65, 16
    %v107 = vpop.permute.xlu0 %106
    %108 = vrot.lane.b32.xlu0 %v68, 16
    %v109 = vpop.permute.xlu0 %108
    %110 = vrot.lane.b32.xlu0 %v71, 16
    %v111 = vpop.permute.xlu0 %110
    %112 = vrot.lane.b32.xlu0 %v74, 16
    %v113 = vpop.permute.xlu0 %112
    %114 = vrot.lane.b32.xlu0 %v77, 16
    %v115 = vpop.permute.xlu0 %114
    %116 = vrot.lane.b32.xlu0 %v80, 16
    %v117 = vpop.permute.xlu0 %116
    %118 = vrot.lane.b32.xlu0 %v83, 16
    %v119 = vpop.permute.xlu0 %118
    %120 = vrot.lane.b32.xlu0 %v86, 16
    %v121 = vpop.permute.xlu0 %120
    %122 = vrot.lane.b32.xlu0 %v89, 16
    %v123 = vpop.permute.xlu0 %122
    %124 = vrot.lane.b32.xlu0 %v92, 16
    %v125 = vpop.permute.xlu0 %124
    %126 = vrot.lane.b32.xlu0 %v95, 16
    %v127 = vpop.permute.xlu0 %126
    %v128 = vsel %vm47, %v97, %v25
    %v129 = vsel %vm47, %v99, %v26
    %v130 = vsel %vm47, %v101, %v27
    %v131 = vsel %vm47, %v103, %v28
    %v132 = vsel %vm47, %v105, %v29
    %v133 = vsel %vm47, %v107, %v30
    %v134 = vsel %vm47, %v109, %v31
    %v135 = vsel %vm47, %v111, %v32
    %v136 = vsel %vm47, %v113, %v33
    %v137 = vsel %vm47, %v115, %v34
    %v138 = vsel %vm47, %v117, %v35
    %v139 = vsel %vm47, %v119, %v36
    %v140 = vsel %vm47, %v121, %v37
    %v141 = vsel %vm47, %v123, %v38
    %v142 = vsel %vm47, %v125, %v39
    %v143 = vsel %vm47, %v127, %v40
    %160 = vrot.lane.b32.xlu0 %v128, 113
    %v161 = vpop.permute.xlu0 %160
    %162 = vrot.lane.b32.xlu0 %v129, 113
    %v163 = vpop.permute.xlu0 %162
    %164 = vrot.lane.b32.xlu0 %v130, 113
    %v165 = vpop.permute.xlu0 %164
    %166 = vrot.lane.b32.xlu0 %v131, 113
    %v167 = vpop.permute.xlu0 %166
    %168 = vrot.lane.b32.xlu0 %v132, 113
    %v169 = vpop.permute.xlu0 %168
    %170 = vrot.lane.b32.xlu0 %v133, 113
    %v171 = vpop.permute.xlu0 %170
    %172 = vrot.lane.b32.xlu0 %v134, 113
    %v173 = vpop.permute.xlu0 %172
    %174 = vrot.lane.b32.xlu0 %v135, 113
    %v175 = vpop.permute.xlu0 %174
    %176 = vrot.lane.b32.xlu0 %v136, 113
    %v177 = vpop.permute.xlu0 %176
    %178 = vrot.lane.b32.xlu0 %v137, 113
    %v179 = vpop.permute.xlu0 %178
    %180 = vrot.lane.b32.xlu0 %v138, 113
    %v181 = vpop.permute.xlu0 %180
    %182 = vrot.lane.b32.xlu0 %v139, 113
    %v183 = vpop.permute.xlu0 %182
    %184 = vrot.lane.b32.xlu0 %v140, 113
    %v185 = vpop.permute.xlu0 %184
    %186 = vrot.lane.b32.xlu0 %v141, 113
    %v187 = vpop.permute.xlu0 %186
    %188 = vrot.lane.b32.xlu0 %v142, 113
    %v189 = vpop.permute.xlu0 %188
    %190 = vrot.lane.b32.xlu0 %v143, 113
    %v191 = vpop.permute.xlu0 %190
    %v208 = vsel %vm46, 0.0, %v161
    %v209 = vsel %vm46, 0.0, %v163
    %v210 = vsel %vm46, 0.0, %v165
    %v211 = vsel %vm46, 0.0, %v167
    %v212 = vsel %vm46, 0.0, %v169
    %v213 = vsel %vm46, 0.0, %v171
    %v214 = vsel %vm46, 0.0, %v173
    %v215 = vsel %vm46, 0.0, %v175
    %v216 = vsel %vm46, 0.0, %v177
    %v217 = vsel %vm46, 0.0, %v179
    %v218 = vsel %vm46, 0.0, %v181
    %v219 = vsel %vm46, 0.0, %v183
    %v220 = vsel %vm46, 0.0, %v185
    %v221 = vsel %vm46, 0.0, %v187
    %v222 = vsel %vm46, 0.0, %v189
    %v223 = vsel %vm46, 0.0, %v191
    %vm224 = vcmp.eq.s32.totalorder %v42, 15
    %225 = vrot.lane.b32.xlu0 %v128, 127
    %v226 = vpop.permute.xlu0 %225
    %227 = vrot.lane.b32.xlu0 %v129, 127
    %v228 = vpop.permute.xlu0 %227
    %229 = vrot.lane.b32.xlu0 %v130, 127
    %v230 = vpop.permute.xlu0 %229
    %231 = vrot.lane.b32.xlu0 %v131, 127
    %v232 = vpop.permute.xlu0 %231
    %233 = vrot.lane.b32.xlu0 %v132, 127
    %v234 = vpop.permute.xlu0 %233
    %235 = vrot.lane.b32.xlu0 %v133, 127
    %v236 = vpop.permute.xlu0 %235
    %237 = vrot.lane.b32.xlu0 %v134, 127
    %v238 = vpop.permute.xlu0 %237
    %239 = vrot.lane.b32.xlu0 %v135, 127
    %v240 = vpop.permute.xlu0 %239
    %241 = vrot.lane.b32.xlu0 %v136, 127
    %v242 = vpop.permute.xlu0 %241
    %243 = vrot.lane.b32.xlu0 %v137, 127
    %v244 = vpop.permute.xlu0 %243
    %245 = vrot.lane.b32.xlu0 %v138, 127
    %v246 = vpop.permute.xlu0 %245
    %247 = vrot.lane.b32.xlu0 %v139, 127
    %v248 = vpop.permute.xlu0 %247
    %249 = vrot.lane.b32.xlu0 %v140, 127
    %v250 = vpop.permute.xlu0 %249
    %251 = vrot.lane.b32.xlu0 %v141, 127
    %v252 = vpop.permute.xlu0 %251
    %253 = vrot.lane.b32.xlu0 %v142, 127
    %v254 = vpop.permute.xlu0 %253
    %255 = vrot.lane.b32.xlu0 %v143, 127
    %v256 = vpop.permute.xlu0 %255
    %v273 = vsel %vm224, 0.0, %v226
    %v274 = vsel %vm224, 0.0, %v228
    %v275 = vsel %vm224, 0.0, %v230
    %v276 = vsel %vm224, 0.0, %v232
    %v277 = vsel %vm224, 0.0, %v234
    %v278 = vsel %vm224, 0.0, %v236
    %v279 = vsel %vm224, 0.0, %v238
    %v280 = vsel %vm224, 0.0, %v240
    %v281 = vsel %vm224, 0.0, %v242
    %v282 = vsel %vm224, 0.0, %v244
    %v283 = vsel %vm224, 0.0, %v246
    %v284 = vsel %vm224, 0.0, %v248
    %v285 = vsel %vm224, 0.0, %v250
    %v286 = vsel %vm224, 0.0, %v252
    %v287 = vsel %vm224, 0.0, %v254
    %v288 = vsel %vm224, 0.0, %v256
    %v289 = vadd.f32 %v25, %v208
    %v290 = vadd.f32 %v26, %v209
    %v291 = vadd.f32 %v27, %v210
    %v292 = vadd.f32 %v28, %v211
    %v293 = vadd.f32 %v29, %v212
    %v294 = vadd.f32 %v30, %v213
    %v295 = vadd.f32 %v31, %v214
    %v296 = vadd.f32 %v32, %v215
    %v297 = vadd.f32 %v33, %v216
    %v298 = vadd.f32 %v34, %v217
    %v299 = vadd.f32 %v35, %v218
    %v300 = vadd.f32 %v36, %v219
    %v301 = vadd.f32 %v37, %v220
    %v302 = vadd.f32 %v38, %v221
    %v303 = vadd.f32 %v39, %v222
    %v304 = vadd.f32 %v40, %v223
    %v305 = vadd.f32 %v289, %v273
    %v306 = vadd.f32 %v290, %v274
    %v307 = vadd.f32 %v291, %v275
    %v308 = vadd.f32 %v292, %v276
    %v309 = vadd.f32 %v293, %v277
    %v310 = vadd.f32 %v294, %v278
    %v311 = vadd.f32 %v295, %v279
    %v312 = vadd.f32 %v296, %v280
    %v313 = vadd.f32 %v297, %v281
    %v314 = vadd.f32 %v298, %v282
    %v315 = vadd.f32 %v299, %v283
    %v316 = vadd.f32 %v300, %v284
    %v317 = vadd.f32 %v301, %v285
    %v318 = vadd.f32 %v302, %v286
    %v319 = vadd.f32 %v303, %v287
    %v320 = vadd.f32 %v304, %v288
    %vm321 = vcmp.eq.s32.totalorder %v44, 0
    %vm322 = vcmp.eq.s32.totalorder %v45, 0
    %v323 = vrot.slane %v305, 7
    %v324 = vrot.slane %v307, 7
    %v325 = vrot.slane %v309, 7
    %v326 = vrot.slane %v311, 7
    %v327 = vrot.slane %v313, 7
    %v328 = vrot.slane %v315, 7
    %v329 = vrot.slane %v317, 7
    %v330 = vrot.slane %v319, 7
    %v331 = vrot.slane %v306, 7
    %v332 = vrot.slane %v308, 7
    %v333 = vrot.slane %v310, 7
    %v334 = vrot.slane %v312, 7
    %v335 = vrot.slane %v314, 7
    %v336 = vrot.slane %v316, 7
    %v337 = vrot.slane %v318, 7
    %v338 = vrot.slane %v320, 7
    %vm339 = vcmp.lt.s32.totalorder %v44, 1
    %v340 = vsel %vm339, %v323, %v331
    %v341 = vsel %vm339, %v324, %v332
    %v342 = vsel %vm339, %v325, %v333
    %v343 = vsel %vm339, %v326, %v334
    %v344 = vsel %vm339, %v327, %v335
    %v345 = vsel %vm339, %v328, %v336
    %v346 = vsel %vm339, %v329, %v337
    %v347 = vsel %vm339, %v330, %v338
    %v348 = vsel %vm339, %v331, %v323
    %v349 = vsel %vm339, %v332, %v324
    %v350 = vsel %vm339, %v333, %v325
    %v351 = vsel %vm339, %v334, %v326
    %v352 = vsel %vm339, %v335, %v327
    %v353 = vsel %vm339, %v336, %v328
    %v354 = vsel %vm339, %v337, %v329
    %v355 = vsel %vm339, %v338, %v330
    %v356 = vsel %vm321, 0.0, %v348
    %v357 = vsel %vm322, 0.0, %v340
    %v358 = vsel %vm321, 0.0, %v349
    %v359 = vsel %vm322, 0.0, %v341
    %v360 = vsel %vm321, 0.0, %v350
    %v361 = vsel %vm322, 0.0, %v342
    %v362 = vsel %vm321, 0.0, %v351
    %v363 = vsel %vm322, 0.0, %v343
    %v364 = vsel %vm321, 0.0, %v352
    %v365 = vsel %vm322, 0.0, %v344
    %v366 = vsel %vm321, 0.0, %v353
    %v367 = vsel %vm322, 0.0, %v345
    %v368 = vsel %vm321, 0.0, %v354
    %v369 = vsel %vm322, 0.0, %v346
    %v370 = vsel %vm321, 0.0, %v355
    %v371 = vsel %vm322, 0.0, %v347
    %vm372 = vcmp.eq.s32.totalorder %v44, 15
    %vm373 = vcmp.eq.s32.totalorder %v45, 15
    %v374 = vrot.slane %v305, 1
    %v375 = vrot.slane %v307, 1
    %v376 = vrot.slane %v309, 1
    %v377 = vrot.slane %v311, 1
    %v378 = vrot.slane %v313, 1
    %v379 = vrot.slane %v315, 1
    %v380 = vrot.slane %v317, 1
    %v381 = vrot.slane %v319, 1
    %v382 = vrot.slane %v306, 1
    %v383 = vrot.slane %v308, 1
    %v384 = vrot.slane %v310, 1
    %v385 = vrot.slane %v312, 1
    %v386 = vrot.slane %v314, 1
    %v387 = vrot.slane %v316, 1
    %v388 = vrot.slane %v318, 1
    %v389 = vrot.slane %v320, 1
    %vm390 = vcmp.lt.s32.totalorder %v44, 7
    %v391 = vsel %vm390, %v374, %v382
    %v392 = vsel %vm390, %v375, %v383
    %v393 = vsel %vm390, %v376, %v384
    %v394 = vsel %vm390, %v377, %v385
    %v395 = vsel %vm390, %v378, %v386
    %v396 = vsel %vm390, %v379, %v387
    %v397 = vsel %vm390, %v380, %v388
    %v398 = vsel %vm390, %v381, %v389
    %v399 = vsel %vm390, %v382, %v374
    %v400 = vsel %vm390, %v383, %v375
    %v401 = vsel %vm390, %v384, %v376
    %v402 = vsel %vm390, %v385, %v377
    %v403 = vsel %vm390, %v386, %v378
    %v404 = vsel %vm390, %v387, %v379
    %v405 = vsel %vm390, %v388, %v380
    %v406 = vsel %vm390, %v389, %v381
    %v407 = vsel %vm372, 0.0, %v391
    %v408 = vsel %vm373, 0.0, %v399
    %v409 = vsel %vm372, 0.0, %v392
    %v410 = vsel %vm373, 0.0, %v400
    %v411 = vsel %vm372, 0.0, %v393
    %v412 = vsel %vm373, 0.0, %v401
    %v413 = vsel %vm372, 0.0, %v394
    %v414 = vsel %vm373, 0.0, %v402
    %v415 = vsel %vm372, 0.0, %v395
    %v416 = vsel %vm373, 0.0, %v403
    %v417 = vsel %vm372, 0.0, %v396
    %v418 = vsel %vm373, 0.0, %v404
    %v419 = vsel %vm372, 0.0, %v397
    %v420 = vsel %vm373, 0.0, %v405
    %v421 = vsel %vm372, 0.0, %v398
    %v422 = vsel %vm373, 0.0, %v406
    %v423 = vadd.f32 %v305, %v356
    %v424 = vadd.f32 %v306, %v357
    %v425 = vadd.f32 %v307, %v358
    %v426 = vadd.f32 %v308, %v359
    %v427 = vadd.f32 %v309, %v360
    %v428 = vadd.f32 %v310, %v361
    %v429 = vadd.f32 %v311, %v362
    %v430 = vadd.f32 %v312, %v363
    %v431 = vadd.f32 %v313, %v364
    %v432 = vadd.f32 %v314, %v365
    %v433 = vadd.f32 %v315, %v366
    %v434 = vadd.f32 %v316, %v367
    %v435 = vadd.f32 %v317, %v368
    %v436 = vadd.f32 %v318, %v369
    %v437 = vadd.f32 %v319, %v370
    %v438 = vadd.f32 %v320, %v371
    %v439 = vadd.f32 %v423, %v407
    %v440 = vadd.f32 %v424, %v408
    %v441 = vadd.f32 %v425, %v409
    %v442 = vadd.f32 %v426, %v410
    %v443 = vadd.f32 %v427, %v411
    %v444 = vadd.f32 %v428, %v412
    %v445 = vadd.f32 %v429, %v413
    %v446 = vadd.f32 %v430, %v414
    %v447 = vadd.f32 %v431, %v415
    %v448 = vadd.f32 %v432, %v416
    %v449 = vadd.f32 %v433, %v417
    %v450 = vadd.f32 %v434, %v418
    %v451 = vadd.f32 %v435, %v419
    %v452 = vadd.f32 %v436, %v420
    %v453 = vadd.f32 %v437, %v421
    %v454 = vadd.f32 %v438, %v422
    %v455 = vmul.f32 %v25, 9.0
    %v456 = vmul.f32 %v26, 9.0
    %v457 = vmul.f32 %v27, 9.0
    %v458 = vmul.f32 %v28, 9.0
    %v459 = vmul.f32 %v29, 9.0
    %v460 = vmul.f32 %v30, 9.0
    %v461 = vmul.f32 %v31, 9.0
    %v462 = vmul.f32 %v32, 9.0
    %v463 = vmul.f32 %v33, 9.0
    %v464 = vmul.f32 %v34, 9.0
    %v465 = vmul.f32 %v35, 9.0
    %v466 = vmul.f32 %v36, 9.0
    %v467 = vmul.f32 %v37, 9.0
    %v468 = vmul.f32 %v38, 9.0
    %v469 = vmul.f32 %v39, 9.0
    %v470 = vmul.f32 %v40, 9.0
    %v471 = vsub.f32 %v455, %v439
    %v472 = vsub.f32 %v456, %v440
    %v473 = vsub.f32 %v457, %v441
    %v474 = vsub.f32 %v458, %v442
    %v475 = vsub.f32 %v459, %v443
    %v476 = vsub.f32 %v460, %v444
    %v477 = vsub.f32 %v461, %v445
    %v478 = vsub.f32 %v462, %v446
    %v479 = vsub.f32 %v463, %v447
    %v480 = vsub.f32 %v464, %v448
    %v481 = vsub.f32 %v465, %v449
    %v482 = vsub.f32 %v466, %v450
    %v483 = vsub.f32 %v467, %v451
    %v484 = vsub.f32 %v468, %v452
    %v485 = vsub.f32 %v469, %v453
    %v486 = vsub.f32 %v470, %v454
    %vm487 = vcmask 130048
    %488 = vst.msk [vmem:[#allocation5] sm:$0xff] %vm487, %v471
    %489 = vst.msk [vmem:[#allocation5 + $0x8] sm:$0xff] %vm487, %v472
    %490 = vst.msk [vmem:[#allocation5 + $0x10] sm:$0xff] %vm487, %v473
    %491 = vst.msk [vmem:[#allocation5 + $0x18] sm:$0xff] %vm487, %v474
    %492 = vst.msk [vmem:[#allocation5 + $0x20] sm:$0xff] %vm487, %v475
    %493 = vst.msk [vmem:[#allocation5 + $0x28] sm:$0xff] %vm487, %v476
    %494 = vst.msk [vmem:[#allocation5 + $0x30] sm:$0xff] %vm487, %v477
    %495 = vst.msk [vmem:[#allocation5 + $0x38] sm:$0xff] %vm487, %v478
    %496 = vst.msk [vmem:[#allocation5 + $0x40] sm:$0xff] %vm487, %v479
    %497 = vst.msk [vmem:[#allocation5 + $0x48] sm:$0xff] %vm487, %v480
    %498 = vst.msk [vmem:[#allocation5 + $0x50] sm:$0xff] %vm487, %v481
    %499 = vst.msk [vmem:[#allocation5 + $0x58] sm:$0xff] %vm487, %v482
    %500 = vst.msk [vmem:[#allocation5 + $0x60] sm:$0xff] %vm487, %v483
    %501 = vst.msk [vmem:[#allocation5 + $0x68] sm:$0xff] %vm487, %v484
    %502 = vst.msk [vmem:[#allocation5 + $0x70] sm:$0xff] %vm487, %v485
    %503 = vst.msk [vmem:[#allocation5 + $0x78] sm:$0xff] %vm487, %v486
    // Predicated region
    $region10: #{tpu_custom_call.1} parent=1 // pred_check
      _
    $region11: #{tpu_custom_call.1} parent=1 // pred_check_branch
      %505 = sbr.rel (0) target = $region13
    $region12: #{tpu_custom_call.1} parent=1 // pred_region
      %507 = vsyncadd [#allocation4], 0
      %s508 = sshll.u32 [#allocation5], 4
      %s509 = int_to_ptr.vmem [resolvable:$true] %s508
      %s510 = sshll.u32 %s1, 4
      %s511 = int_to_ptr.hbm [resolvable:$true] %s510
      %516 = dma.vmem_to_hbm [thread:$0]  %s509, 2048, %s511, [#allocation4], 128, 128, 8
    $region13: #{tpu_custom_call.1} parent=1 // pred_fallthru
      _
    // Predicated region
    $region14: #{tpu_custom_call.1} parent=1 // pred_check
      _
    $region15: #{tpu_custom_call.1} parent=1 // pred_check_branch
      %518 = sbr.rel (0) target = $region17
    $region16: #{tpu_custom_call.1} parent=1 // pred_region
      %520 = dma.done [#allocation4], 2048
    $region17: #{tpu_custom_call.1} parent=1 // pred_fallthru
      _
    %521 = vsyncpa [#allocation3], 1
    %522 = vsyncpa [#allocation4], 1

</llo_original>
